<compile_context>
chip_gen: v5e
topology: v5e:2x2
jax: 0.10.0
libtpu: 0.0.40
codegen_flags: <defaults>
</compile_context>

<pallas_src>
import jax
import jax.numpy as jnp
from jax.experimental import pallas as pl
from jax.experimental.pallas import tpu as pltpu


def _round_up(x: int, m: int) -> int:
    return ((x + m - 1) // m) * m


_TM_MAX = 2048   # outer lane tile per grid step
_CH = 128        # inner lane chunk: whole layer chain stays in vregs


# ----------------------------------------------------------------------------
# Fused kernel: 2-hot (gather + fc1 folded) -> 72->56->32->16->1 MLP + sigmoid.
# Activations are feature-major: (features, lanes), rows on lanes.
# ----------------------------------------------------------------------------
def _spotify_kernel(uidx_ref, tidx_ref,          # (1, TM) int32; tidx already +U
                    a_ref, b1_ref,               # (72, U+T) folded fc1, (72, 1)
                    w2_ref, b2_ref,              # (56, 72), (56, 1)
                    w3_ref, b3_ref,              # (32, 56), (32, 1)
                    w4_ref, b4_ref,              # (16, 32), (16, 1)
                    w5_ref, b5_ref,              # (1, 16),  (1, 1)
                    o_ref):                      # (1, TM) lane-dense output
    tm = o_ref.shape[1]
    vocab = a_ref.shape[1]                       # U + T

    # Resident weights: load once per grid step (tiny, ~25 vregs total).
    a = a_ref[...]
    b1 = b1_ref[...]
    w2 = w2_ref[...]
    b2 = b2_ref[...]
    w3 = w3_ref[...]
    b3 = b3_ref[...]
    w4 = w4_ref[...]
    b4 = b4_ref[...]
    w5 = w5_ref[...]
    b5 = b5_ref[...]

    # Static (trace-time) loop over 128-lane chunks; each chunk's activations
    # (<= (72,128) f32 = 9 vregs) live entirely in vregs, no VMEM spills.
    for c in range(tm // _CH):
        lanes = pl.ds(c * _CH, _CH)
        uidx = uidx_ref[:, lanes]                                    # (1, CH)
        tidx = tidx_ref[:, lanes]                                    # (1, CH)

        # 2-hot gather+fc1: one 1 at row uidx (user) and one at row tidx
        # (track, pre-offset by U in the wrapper).  A @ oh == fc1 pre-act.
        rows = jax.lax.broadcasted_iota(jnp.int32, (vocab, _CH), 0)
        oh = jnp.logical_or(rows == uidx, rows == tidx).astype(jnp.float32)

        h = jnp.maximum(
            jnp.dot(a, oh, preferred_element_type=jnp.float32) + b1, 0.0)   # (72, CH)
        h = jnp.maximum(
            jnp.dot(w2, h, preferred_element_type=jnp.float32) + b2, 0.0)   # (56, CH)
        h = jnp.maximum(
            jnp.dot(w3, h, preferred_element_type=jnp.float32) + b3, 0.0)   # (32, CH)
        h = jnp.maximum(
            jnp.dot(w4, h, preferred_element_type=jnp.float32) + b4, 0.0)   # (16, CH)
        out = jnp.dot(w5, h, preferred_element_type=jnp.float32) + b5       # (1, CH)
        o_ref[:, lanes] = jax.nn.sigmoid(out)    # exp + recip on EUP


# ----------------------------------------------------------------------------
# One-time constant preparation (hoisted out of the per-call path).
# ----------------------------------------------------------------------------
def prepare_spotify_consts(user_embed, track_embed, mlp_params):
    w1, b1, w2, b2, w3, b3, w4, b4, w5, b5 = mlp_params
    feat = user_embed.shape[1]
    n_users = int(user_embed.shape[0])

    col = lambda b: jnp.asarray(b, jnp.float32).reshape(-1, 1)
    w1f = jnp.asarray(w1, jnp.float32)
    # Fold fc1 into the embedding tables (exact: fc1(concat) == A_u[:,u]+A_t[:,t]+b1).
    a_u = w1f[:, :feat] @ user_embed.astype(jnp.float32).T     # (72, U)
    a_t = w1f[:, feat:] @ track_embed.astype(jnp.float32).T    # (72, T)
    a = jnp.concatenate([a_u, a_t], axis=1)                    # (72, U+T)

    consts = (
        a, col(b1),
        jnp.asarray(w2, jnp.float32), col(b2),
        jnp.asarray(w3, jnp.float32), col(b3),
        jnp.asarray(w4, jnp.float32), col(b4),
        jnp.asarray(w5, jnp.float32), col(b5),
    )
    consts = jax.tree_util.tree_map(jax.block_until_ready, consts)
    return n_users, consts


# ----------------------------------------------------------------------------
# Wrapper: pad rows to a lane-dense multiple of 128, tile, call the kernel.
# ----------------------------------------------------------------------------
def spotify_mlp_pallas(u_idx, t_idx, n_users, consts):
    """u_idx, t_idx: (N,) int ids -> sigmoid(MLP(concat(embeds))) of shape (N,)."""
    n = u_idx.shape[0]
    n_pad0 = _round_up(max(n, _CH), _CH)
    if n_pad0 <= _CH:
        tm = _CH
        n_pad = _CH
    else:
        # Guarantee >= 2 grid steps so "parallel" shards across both v7x TCs,
        # while amortizing the ~0.35 us/step overhead with large lane tiles.
        tm = min(_TM_MAX, _round_up((n_pad0 + 1) // 2, _CH))
        n_pad = _round_up(n_pad0, tm)
    grid = (n_pad // tm,)

    pad = n_pad - n
    uidx2d = jnp.pad(u_idx.astype(jnp.int32), (0, pad)).reshape(1, n_pad)
    # Track ids are offset by n_users so one combined table / 2-hot works.
    tidx2d = jnp.pad(t_idx.astype(jnp.int32) + n_users, (0, pad)).reshape(1, n_pad)

    row_spec = pl.BlockSpec((1, tm), lambda i: (0, i))
    const_spec = lambda arr: pl.BlockSpec(arr.shape, lambda i: (0, 0))  # resident

    # TODO(synk): for realistic (large) vocab sizes, replace the one-hot/2-hot
    # matmul + resident (72, U+T) table with a scalar-prefetched row gather
    # (PrefetchScalarGridSpec + pl.Element) so VMEM holds only (72, TM) slabs.
    out = pl.pallas_call(
        _spotify_kernel,
        out_shape=jax.ShapeDtypeStruct((1, n_pad), jnp.float32),
        grid=grid,
        in_specs=[row_spec, row_spec] + [const_spec(a) for a in consts],
        out_specs=row_spec,
        compiler_params=pltpu.CompilerParams(
            dimension_semantics=("parallel",)),   # both TCs on v7x when grid >= 2
    )(uidx2d, tidx2d, *consts)
    return out[0, :n]


# ----------------------------------------------------------------------------
# Full forward matching SpotifyNet.forward.
# users, tracks: int32 (B, S).  Returns pred of shape (B,).
# ----------------------------------------------------------------------------
def spotify_net_forward(users, tracks, n_users, consts):
    # Only position s=0 contributes to sigmoid(out)[:, 0, :].flatten() and the
    # MLP is row-wise, so slice first (S x less work, algebraically exact).
    u0 = users[:, 0]
    t0 = tracks[:, 0]
    return spotify_mlp_pallas(u0, t0, n_users, consts)


# ----------------------------------------------------------------------------
# Deterministic parameter construction (PyTorch-native layouts:
# Linear weight (out, in), bias (out,); Embedding (num, feature)).
# fc1.in_features == 18 == 2 * feature_size  =>  feature_size = 9.
# ----------------------------------------------------------------------------
def init_params(key, user_size, track_size, feature_size):
    ks = jax.random.split(key, 12)
    user_embed = jax.random.normal(ks[0], (user_size, feature_size), jnp.float32)
    track_embed = jax.random.normal(ks[1], (track_size, feature_size), jnp.float32)

    def linear(kw, kb, fan_in, fan_out):
        bound = 1.0 / (float(fan_in) ** 0.5)
        w = jax.random.uniform(kw, (fan_out, fan_in), jnp.float32, -bound, bound)
        b = jax.random.uniform(kb, (fan_out,), jnp.float32, -bound, bound)
        return w, b

    w1, b1 = linear(ks[2], ks[3], 18, 72)
    w2, b2 = linear(ks[4], ks[5], 72, 56)
    w3, b3 = linear(ks[6], ks[7], 56, 32)
    w4, b4 = linear(ks[8], ks[9], 32, 16)
    w5, b5 = linear(ks[10], ks[11], 16, 1)
    mlp = (w1, b1, w2, b2, w3, b3, w4, b4, w5, b5)
    return user_embed, track_embed, mlp


if __name__ == "__main__":
    key = jax.random.PRNGKey(0)
    user_size, track_size, feature_size = 10, 20, 9   # feature_size fixed by fc1(in=18)
    B, S = 2, 8

    k_users, k_tracks, k_params = jax.random.split(key, 3)
    users = jax.random.randint(k_users, (B, S), 0, user_size, dtype=jnp.int32)
    tracks = jax.random.randint(k_tracks, (B, S), 0, track_size, dtype=jnp.int32)

    user_embed, track_embed, mlp_params = init_params(
        k_params, user_size, track_size, feature_size)

    # One-time constant prep (fc1 folded into the embedding tables).
    n_users, consts = prepare_spotify_consts(user_embed, track_embed, mlp_params)

    pred = spotify_net_forward(users, tracks, n_users, consts)
    pred = jax.block_until_ready(pred)

    # Pure-JAX reference mirroring the torch forward exactly (runs all S
    # positions, then slices — proves the pre-slice + fc1 fold are valid).
    def ref_forward(users, tracks, ue_tbl, te_tbl, p):
        w1, b1, w2, b2, w3, b3, w4, b4, w5, b5 = p
        ue = jnp.take(ue_tbl, users, axis=0)       # (B, S, F)
        te = jnp.take(te_tbl, tracks, axis=0)      # (B, S, F)
        x = jnp.concatenate([ue, te], axis=-1)     # (B, S, 18)
        h = jnp.maximum(x @ w1.T + b1, 0.0)
        h = jnp.maximum(h @ w2.T + b2, 0.0)
        h = jnp.maximum(h @ w3.T + b3, 0.0)
        h = jnp.maximum(h @ w4.T + b4, 0.0)
        out = h @ w5.T + b5                        # (B, S, 1)
        return jax.nn.sigmoid(out)[:, 0, :].reshape(-1)

    ref = ref_forward(users, tracks, user_embed, track_embed, mlp_params)

    assert pred.shape == (B,), pred.shape
    assert jnp.allclose(pred, ref, atol=1e-5, rtol=1e-5)
    print("KERNEL_OK")
</pallas_src>

<mosaic_0001>
module attributes {stable_mosaic.version = 11 : i64} {
  func.func @_spotify_kernel(%arg0: i32, %arg1: memref<1x128xi32, #tpu.memory_space<vmem>>, %arg2: memref<1x128xi32, #tpu.memory_space<vmem>>, %arg3: memref<72x30xf32, #tpu.memory_space<vmem>>, %arg4: memref<72x1xf32, #tpu.memory_space<vmem>>, %arg5: memref<56x72xf32, #tpu.memory_space<vmem>>, %arg6: memref<56x1xf32, #tpu.memory_space<vmem>>, %arg7: memref<32x56xf32, #tpu.memory_space<vmem>>, %arg8: memref<32x1xf32, #tpu.memory_space<vmem>>, %arg9: memref<16x32xf32, #tpu.memory_space<vmem>>, %arg10: memref<16x1xf32, #tpu.memory_space<vmem>>, %arg11: memref<1x16xf32, #tpu.memory_space<vmem>>, %arg12: memref<1x1xf32, #tpu.memory_space<vmem>>, %arg13: memref<1x128xf32, #tpu.memory_space<vmem>>) attributes {dimension_semantics = [#tpu.dimension_semantics<parallel>], iteration_bounds = array<i64: 1>, scalar_prefetch = 0 : i64, scratch_operands = 0 : i64, tpu.core_type = #tpu.core_type<tc>, window_params = [{transform_indices = @transform_0, window_bounds = array<i64: 1, 128>}, {transform_indices = @transform_1, window_bounds = array<i64: 1, 128>}, {pipeline_mode = #tpu.pipeline_mode<synchronous>, transform_indices = @transform_2, window_bounds = array<i64: 72, 30>}, {pipeline_mode = #tpu.pipeline_mode<synchronous>, transform_indices = @transform_3, window_bounds = array<i64: 72, 1>}, {pipeline_mode = #tpu.pipeline_mode<synchronous>, transform_indices = @transform_4, window_bounds = array<i64: 56, 72>}, {pipeline_mode = #tpu.pipeline_mode<synchronous>, transform_indices = @transform_5, window_bounds = array<i64: 56, 1>}, {pipeline_mode = #tpu.pipeline_mode<synchronous>, transform_indices = @transform_6, window_bounds = array<i64: 32, 56>}, {pipeline_mode = #tpu.pipeline_mode<synchronous>, transform_indices = @transform_7, window_bounds = array<i64: 32, 1>}, {pipeline_mode = #tpu.pipeline_mode<synchronous>, transform_indices = @transform_8, window_bounds = array<i64: 16, 32>}, {pipeline_mode = #tpu.pipeline_mode<synchronous>, transform_indices = @transform_9, window_bounds = array<i64: 16, 1>}, {pipeline_mode = #tpu.pipeline_mode<synchronous>, transform_indices = @transform_10, window_bounds = array<i64: 1, 16>}, {pipeline_mode = #tpu.pipeline_mode<synchronous>, transform_indices = @transform_11, window_bounds = array<i64: 1, 1>}, {transform_indices = @transform_12, window_bounds = array<i64: 1, 128>}]} {
    %c0 = arith.constant 0 : index
    %c0_0 = arith.constant 0 : index
    %0 = vector.load %arg3[%c0, %c0_0] : memref<72x30xf32, #tpu.memory_space<vmem>>, vector<72x30xf32>
    %c0_1 = arith.constant 0 : index
    %c0_2 = arith.constant 0 : index
    %1 = vector.load %arg4[%c0_1, %c0_2] : memref<72x1xf32, #tpu.memory_space<vmem>>, vector<72x1xf32>
    %c0_3 = arith.constant 0 : index
    %c0_4 = arith.constant 0 : index
    %2 = vector.load %arg5[%c0_3, %c0_4] : memref<56x72xf32, #tpu.memory_space<vmem>>, vector<56x72xf32>
    %c0_5 = arith.constant 0 : index
    %c0_6 = arith.constant 0 : index
    %3 = vector.load %arg6[%c0_5, %c0_6] : memref<56x1xf32, #tpu.memory_space<vmem>>, vector<56x1xf32>
    %c0_7 = arith.constant 0 : index
    %c0_8 = arith.constant 0 : index
    %4 = vector.load %arg7[%c0_7, %c0_8] : memref<32x56xf32, #tpu.memory_space<vmem>>, vector<32x56xf32>
    %c0_9 = arith.constant 0 : index
    %c0_10 = arith.constant 0 : index
    %5 = vector.load %arg8[%c0_9, %c0_10] : memref<32x1xf32, #tpu.memory_space<vmem>>, vector<32x1xf32>
    %c0_11 = arith.constant 0 : index
    %c0_12 = arith.constant 0 : index
    %6 = vector.load %arg9[%c0_11, %c0_12] : memref<16x32xf32, #tpu.memory_space<vmem>>, vector<16x32xf32>
    %c0_13 = arith.constant 0 : index
    %c0_14 = arith.constant 0 : index
    %7 = vector.load %arg10[%c0_13, %c0_14] : memref<16x1xf32, #tpu.memory_space<vmem>>, vector<16x1xf32>
    %c0_15 = arith.constant 0 : index
    %c0_16 = arith.constant 0 : index
    %8 = vector.load %arg11[%c0_15, %c0_16] : memref<1x16xf32, #tpu.memory_space<vmem>>, vector<1x16xf32>
    %c0_17 = arith.constant 0 : index
    %c0_18 = arith.constant 0 : index
    %9 = vector.load %arg12[%c0_17, %c0_18] : memref<1x1xf32, #tpu.memory_space<vmem>>, vector<1x1xf32>
    %c0_19 = arith.constant 0 : index
    %c0_20 = arith.constant 0 : index
    %10 = vector.load %arg1[%c0_19, %c0_20] : memref<1x128xi32, #tpu.memory_space<vmem>>, vector<1x128xi32>
    %c0_21 = arith.constant 0 : index
    %c0_22 = arith.constant 0 : index
    %11 = vector.load %arg2[%c0_21, %c0_22] : memref<1x128xi32, #tpu.memory_space<vmem>>, vector<1x128xi32>
    %12 = tpu.iota {dimensions = array<i32: 0>} : vector<30x128xi32>
    %13 = vector.broadcast %10 : vector<1x128xi32> to vector<30x128xi32>
    %14 = arith.cmpi eq, %12, %13 : vector<30x128xi32>
    %15 = vector.broadcast %11 : vector<1x128xi32> to vector<30x128xi32>
    %16 = arith.cmpi eq, %12, %15 : vector<30x128xi32>
    %17 = arith.ori %14, %16 : vector<30x128xi1>
    %18 = arith.extui %17 : vector<30x128xi1> to vector<30x128xi32>
    %19 = arith.sitofp %18 : vector<30x128xi32> to vector<30x128xf32>
    %cst = arith.constant dense<0.000000e+00> : vector<72x128xf32>
    %20 = tpu.matmul %0, %19, %cst {dimension_numbers = #tpu.dot_dimension_numbers<[1], [0], [0], [1], [0, 0, 1, 1], [], []>} : vector<72x30xf32>, vector<30x128xf32>, vector<72x128xf32> -> vector<72x128xf32>
    %21 = vector.broadcast %1 : vector<72x1xf32> to vector<72x128xf32>
    %22 = arith.addf %20, %21 : vector<72x128xf32>
    %cst_23 = arith.constant 0.000000e+00 : f32
    %23 = vector.broadcast %cst_23 : f32 to vector<72x128xf32>
    %24 = arith.maximumf %22, %23 : vector<72x128xf32>
    %cst_24 = arith.constant dense<0.000000e+00> : vector<56x128xf32>
    %25 = tpu.matmul %2, %24, %cst_24 {dimension_numbers = #tpu.dot_dimension_numbers<[1], [0], [0], [1], [0, 0, 1, 1], [], []>} : vector<56x72xf32>, vector<72x128xf32>, vector<56x128xf32> -> vector<56x128xf32>
    %26 = vector.broadcast %3 : vector<56x1xf32> to vector<56x128xf32>
    %27 = arith.addf %25, %26 : vector<56x128xf32>
    %cst_25 = arith.constant 0.000000e+00 : f32
    %28 = vector.broadcast %cst_25 : f32 to vector<56x128xf32>
    %29 = arith.maximumf %27, %28 : vector<56x128xf32>
    %cst_26 = arith.constant dense<0.000000e+00> : vector<32x128xf32>
    %30 = tpu.matmul %4, %29, %cst_26 {dimension_numbers = #tpu.dot_dimension_numbers<[1], [0], [0], [1], [0, 0, 1, 1], [], []>} : vector<32x56xf32>, vector<56x128xf32>, vector<32x128xf32> -> vector<32x128xf32>
    %31 = vector.broadcast %5 : vector<32x1xf32> to vector<32x128xf32>
    %32 = arith.addf %30, %31 : vector<32x128xf32>
    %cst_27 = arith.constant 0.000000e+00 : f32
    %33 = vector.broadcast %cst_27 : f32 to vector<32x128xf32>
    %34 = arith.maximumf %32, %33 : vector<32x128xf32>
    %cst_28 = arith.constant dense<0.000000e+00> : vector<16x128xf32>
    %35 = tpu.matmul %6, %34, %cst_28 {dimension_numbers = #tpu.dot_dimension_numbers<[1], [0], [0], [1], [0, 0, 1, 1], [], []>} : vector<16x32xf32>, vector<32x128xf32>, vector<16x128xf32> -> vector<16x128xf32>
    %36 = vector.broadcast %7 : vector<16x1xf32> to vector<16x128xf32>
    %37 = arith.addf %35, %36 : vector<16x128xf32>
    %cst_29 = arith.constant 0.000000e+00 : f32
    %38 = vector.broadcast %cst_29 : f32 to vector<16x128xf32>
    %39 = arith.maximumf %37, %38 : vector<16x128xf32>
    %cst_30 = arith.constant dense<0.000000e+00> : vector<1x128xf32>
    %40 = tpu.matmul %8, %39, %cst_30 {dimension_numbers = #tpu.dot_dimension_numbers<[1], [0], [0], [1], [0, 0, 1, 1], [], []>} : vector<1x16xf32>, vector<16x128xf32>, vector<1x128xf32> -> vector<1x128xf32>
    %41 = vector.broadcast %9 : vector<1x1xf32> to vector<1x128xf32>
    %42 = arith.addf %40, %41 : vector<1x128xf32>
    %43 = arith.negf %42 : vector<1x128xf32>
    %44 = math.exp %43 : vector<1x128xf32>
    %cst_31 = arith.constant 1.000000e+00 : f32
    %45 = vector.broadcast %cst_31 : f32 to vector<1x128xf32>
    %46 = arith.addf %45, %44 : vector<1x128xf32>
    %47 = arith.divf %45, %46 : vector<1x128xf32>
    %c0_32 = arith.constant 0 : index
    %c0_33 = arith.constant 0 : index
    %48 = vector.load %arg13[%c0_32, %c0_33] : memref<1x128xf32, #tpu.memory_space<vmem>>, vector<1x128xf32>
    tpu.vector_store %arg13[%c0_32, %c0_33], %47 {strides = array<i32>} : memref<1x128xf32, #tpu.memory_space<vmem>>, vector<1x128xf32>,
    return
  }
  func.func @transform_0(%arg0: i32) -> (i32, i32) {
    %c0_i32 = arith.constant 0 : i32
    %c0_i32_0 = arith.constant 0 : i32
    return %c0_i32, %arg0 : i32, i32
  }
  func.func @transform_1(%arg0: i32) -> (i32, i32) {
    %c0_i32 = arith.constant 0 : i32
    %c0_i32_0 = arith.constant 0 : i32
    return %c0_i32, %arg0 : i32, i32
  }
  func.func @transform_2(%arg0: i32) -> (i32, i32) {
    %c0_i32 = arith.constant 0 : i32
    %c0_i32_0 = arith.constant 0 : i32
    %c0_i32_1 = arith.constant 0 : i32
    return %c0_i32, %c0_i32_0 : i32, i32
  }
  func.func @transform_3(%arg0: i32) -> (i32, i32) {
    %c0_i32 = arith.constant 0 : i32
    %c0_i32_0 = arith.constant 0 : i32
    %c0_i32_1 = arith.constant 0 : i32
    return %c0_i32, %c0_i32_0 : i32, i32
  }
  func.func @transform_4(%arg0: i32) -> (i32, i32) {
    %c0_i32 = arith.constant 0 : i32
    %c0_i32_0 = arith.constant 0 : i32
    %c0_i32_1 = arith.constant 0 : i32
    return %c0_i32, %c0_i32_0 : i32, i32
  }
  func.func @transform_5(%arg0: i32) -> (i32, i32) {
    %c0_i32 = arith.constant 0 : i32
    %c0_i32_0 = arith.constant 0 : i32
    %c0_i32_1 = arith.constant 0 : i32
    return %c0_i32, %c0_i32_0 : i32, i32
  }
  func.func @transform_6(%arg0: i32) -> (i32, i32) {
    %c0_i32 = arith.constant 0 : i32
    %c0_i32_0 = arith.constant 0 : i32
    %c0_i32_1 = arith.constant 0 : i32
    return %c0_i32, %c0_i32_0 : i32, i32
  }
  func.func @transform_7(%arg0: i32) -> (i32, i32) {
    %c0_i32 = arith.constant 0 : i32
    %c0_i32_0 = arith.constant 0 : i32
    %c0_i32_1 = arith.constant 0 : i32
    return %c0_i32, %c0_i32_0 : i32, i32
  }
  func.func @transform_8(%arg0: i32) -> (i32, i32) {
    %c0_i32 = arith.constant 0 : i32
    %c0_i32_0 = arith.constant 0 : i32
    %c0_i32_1 = arith.constant 0 : i32
    return %c0_i32, %c0_i32_0 : i32, i32
  }
  func.func @transform_9(%arg0: i32) -> (i32, i32) {
    %c0_i32 = arith.constant 0 : i32
    %c0_i32_0 = arith.constant 0 : i32
    %c0_i32_1 = arith.constant 0 : i32
    return %c0_i32, %c0_i32_0 : i32, i32
  }
  func.func @transform_10(%arg0: i32) -> (i32, i32) {
    %c0_i32 = arith.constant 0 : i32
    %c0_i32_0 = arith.constant 0 : i32
    %c0_i32_1 = arith.constant 0 : i32
    return %c0_i32, %c0_i32_0 : i32, i32
  }
  func.func @transform_11(%arg0: i32) -> (i32, i32) {
    %c0_i32 = arith.constant 0 : i32
    %c0_i32_0 = arith.constant 0 : i32
    %c0_i32_1 = arith.constant 0 : i32
    return %c0_i32, %c0_i32_0 : i32, i32
  }
  func.func @transform_12(%arg0: i32) -> (i32, i32) {
    %c0_i32 = arith.constant 0 : i32
    %c0_i32_0 = arith.constant 0 : i32
    return %c0_i32, %arg0 : i32, i32
  }
}

</mosaic_0001>

<llo_original>
// kernel: tpu_custom_call.1
$region0: #{tpu_custom_call.1}
  #allocation0 [shape = 'u32[]', space=smem, size = 0x4, offset = 0x4, fixed_abs, tag = 'smem constant byte address 0x4 - core index']
  #allocation1 [shape = 'u32[72,128]{1,0:T(1,128)}', space=vmem, size = 0x9000, scoped, tag = 'internal scratch']
  #allocation2 [shape = 'f32[1,1]{1,0:T(1,128)S(1)}', space=vmem, size = 0x200, scoped, tag = 'scoped memory for tpu_custom_call.1']
  %s0 = inlined_call_operand.vmem [shape: s32[1,128], index: 0, kind: input, shape index: {}]
  %s1 = inlined_call_operand.vmem [shape: s32[1,128], index: 1, kind: input, shape index: {}]
  %s2 = inlined_call_operand.vmem [shape: f32[72,30], index: 2, kind: input, shape index: {}]
  %s3 = inlined_call_operand.vmem [shape: f32[72,1], index: 3, kind: input, shape index: {}]
  %s4 = inlined_call_operand.vmem [shape: f32[56,72], index: 4, kind: input, shape index: {}]
  %s5 = inlined_call_operand.vmem [shape: f32[56,1], index: 5, kind: input, shape index: {}]
  %s6 = inlined_call_operand.vmem [shape: f32[32,56], index: 6, kind: input, shape index: {}]
  %s7 = inlined_call_operand.vmem [shape: f32[32,1], index: 7, kind: input, shape index: {}]
  %s8 = inlined_call_operand.vmem [shape: f32[16,32], index: 8, kind: input, shape index: {}]
  %s9 = inlined_call_operand.vmem [shape: f32[16,1], index: 9, kind: input, shape index: {}]
  %s10 = inlined_call_operand.vmem [shape: f32[1,16], index: 10, kind: input, shape index: {}]
  %s11 = inlined_call_operand.<no memory space> [shape: f32[1,1], index: 11, kind: input, shape index: {}]
  %s12 = inlined_call_operand.hbm [shape: f32[1,128], index: 12, kind: output, shape index: {}]
  %s13 = sld [smem:[#allocation0]]
  $region58: #{tpu_custom_call.1} parent=0
    _
  %s15 = ssub.s32 1, %s13
  %s16 = scalar_select 0, %s15, %s13
  %v17 = vstv %s11
  %18 = vst [vmem:[#allocation2] sm:$0x1] %v17
  $region1: #{tpu_custom_call.1} parent=0
    #allocation3 [shape = 'u8[512]{0}', space=vmem, size = 0x400, scoped, tag = 'output window, operand 0, single buffered']
    #allocation4 [shape = 's32[1]{0}', space=sflag, size = 0x4, scoped, tag = 'scoped memory for tpu_custom_call.1']
    %19 = vsyncpa [#allocation4], 0
    // Predicated region
    $region2: #{tpu_custom_call.1} parent=1 // pred_check
      _
    $region3: #{tpu_custom_call.1} parent=1 // pred_check_branch
      %21 = sbr.rel (0) target = $region5
    $region4: #{tpu_custom_call.1} parent=1 // pred_region
      _
    $region5: #{tpu_custom_call.1} parent=1 // pred_fallthru
      _
    // Predicated region
    $region6: #{tpu_custom_call.1} parent=1 // pred_check
      _
    $region7: #{tpu_custom_call.1} parent=1 // pred_check_branch
      %23 = sbr.rel (0) target = $region9
    $region8: #{tpu_custom_call.1} parent=1 // pred_region
      _
    $region9: #{tpu_custom_call.1} parent=1 // pred_fallthru
      _
    // Predicated region
    $region10: #{tpu_custom_call.1} parent=1 // pred_check
      _
    $region11: #{tpu_custom_call.1} parent=1 // pred_check_branch
      %25 = sbr.rel (0) target = $region13
    $region12: #{tpu_custom_call.1} parent=1 // pred_region
      _
    $region13: #{tpu_custom_call.1} parent=1 // pred_fallthru
      _
    // Predicated region
    $region14: #{tpu_custom_call.1} parent=1 // pred_check
      _
    $region15: #{tpu_custom_call.1} parent=1 // pred_check_branch
      %27 = sbr.rel (0) target = $region17
    $region16: #{tpu_custom_call.1} parent=1 // pred_region
      _
    $region17: #{tpu_custom_call.1} parent=1 // pred_fallthru
      _
    // Predicated region
    $region18: #{tpu_custom_call.1} parent=1 // pred_check
      _
    $region19: #{tpu_custom_call.1} parent=1 // pred_check_branch
      %29 = sbr.rel (0) target = $region21
    $region20: #{tpu_custom_call.1} parent=1 // pred_region
      _
    $region21: #{tpu_custom_call.1} parent=1 // pred_fallthru
      _
    // Predicated region
    $region22: #{tpu_custom_call.1} parent=1 // pred_check
      _
    $region23: #{tpu_custom_call.1} parent=1 // pred_check_branch
      %31 = sbr.rel (0) target = $region25
    $region24: #{tpu_custom_call.1} parent=1 // pred_region
      _
    $region25: #{tpu_custom_call.1} parent=1 // pred_fallthru
      _
    // Predicated region
    $region26: #{tpu_custom_call.1} parent=1 // pred_check
      _
    $region27: #{tpu_custom_call.1} parent=1 // pred_check_branch
      %33 = sbr.rel (0) target = $region29
    $region28: #{tpu_custom_call.1} parent=1 // pred_region
      _
    $region29: #{tpu_custom_call.1} parent=1 // pred_fallthru
      _
    // Predicated region
    $region30: #{tpu_custom_call.1} parent=1 // pred_check
      _
    $region31: #{tpu_custom_call.1} parent=1 // pred_check_branch
      %35 = sbr.rel (0) target = $region33
    $region32: #{tpu_custom_call.1} parent=1 // pred_region
      _
    $region33: #{tpu_custom_call.1} parent=1 // pred_fallthru
      _
    // Predicated region
    $region34: #{tpu_custom_call.1} parent=1 // pred_check
      _
    $region35: #{tpu_custom_call.1} parent=1 // pred_check_branch
      %37 = sbr.rel (0) target = $region37
    $region36: #{tpu_custom_call.1} parent=1 // pred_region
      _
    $region37: #{tpu_custom_call.1} parent=1 // pred_fallthru
      _
    // Predicated region
    $region38: #{tpu_custom_call.1} parent=1 // pred_check
      _
    $region39: #{tpu_custom_call.1} parent=1 // pred_check_branch
      %39 = sbr.rel (0) target = $region41
    $region40: #{tpu_custom_call.1} parent=1 // pred_region
      _
    $region41: #{tpu_custom_call.1} parent=1 // pred_fallthru
      _
    // Predicated region
    $region42: #{tpu_custom_call.1} parent=1 // pred_check
      _
    $region43: #{tpu_custom_call.1} parent=1 // pred_check_branch
      %41 = sbr.rel (0) target = $region45
    $region44: #{tpu_custom_call.1} parent=1 // pred_region
      _
    $region45: #{tpu_custom_call.1} parent=1 // pred_fallthru
      _
    // Predicated region
    $region46: #{tpu_custom_call.1} parent=1 // pred_check
      _
    $region47: #{tpu_custom_call.1} parent=1 // pred_check_branch
      %43 = sbr.rel (0) target = $region49
    $region48: #{tpu_custom_call.1} parent=1 // pred_region
      _
    $region49: #{tpu_custom_call.1} parent=1 // pred_fallthru
      _
    %v44 = vld [vmem:[%s2] sm:$0xff]
    %v45 = vld [vmem:[%s2 + $0x8] sm:$0xff]
    %v46 = vld [vmem:[%s2 + $0x10] sm:$0xff]
    %v47 = vld [vmem:[%s2 + $0x18] sm:$0xff]
    %v48 = vld [vmem:[%s2 + $0x20] sm:$0xff]
    %v49 = vld [vmem:[%s2 + $0x28] sm:$0xff]
    %v50 = vld [vmem:[%s2 + $0x30] sm:$0xff]
    %v51 = vld [vmem:[%s2 + $0x38] sm:$0xff]
    %v52 = vld [vmem:[%s2 + $0x40] sm:$0xff]
    %v53 = vld [vmem:[%s3] sm:$0xff]
    %v54 = vld [vmem:[%s3 + $0x8] sm:$0xff]
    %v55 = vld [vmem:[%s3 + $0x10] sm:$0xff]
    %v56 = vld [vmem:[%s3 + $0x18] sm:$0xff]
    %v57 = vld [vmem:[%s3 + $0x20] sm:$0xff]
    %v58 = vld [vmem:[%s3 + $0x28] sm:$0xff]
    %v59 = vld [vmem:[%s3 + $0x30] sm:$0xff]
    %v60 = vld [vmem:[%s3 + $0x38] sm:$0xff]
    %v61 = vld [vmem:[%s3 + $0x40] sm:$0xff]
    %v62 = vld [vmem:[%s4] sm:$0xff]
    %v63 = vld [vmem:[%s4 + $0x8] sm:$0xff]
    %v64 = vld [vmem:[%s4 + $0x10] sm:$0xff]
    %v65 = vld [vmem:[%s4 + $0x18] sm:$0xff]
    %v66 = vld [vmem:[%s4 + $0x20] sm:$0xff]
    %v67 = vld [vmem:[%s4 + $0x28] sm:$0xff]
    %v68 = vld [vmem:[%s4 + $0x30] sm:$0xff]
    %v69 = vld [vmem:[%s5] sm:$0xff]
    %v70 = vld [vmem:[%s5 + $0x8] sm:$0xff]
    %v71 = vld [vmem:[%s5 + $0x10] sm:$0xff]
    %v72 = vld [vmem:[%s5 + $0x18] sm:$0xff]
    %v73 = vld [vmem:[%s5 + $0x20] sm:$0xff]
    %v74 = vld [vmem:[%s5 + $0x28] sm:$0xff]
    %v75 = vld [vmem:[%s5 + $0x30] sm:$0xff]
    %v76 = vld [vmem:[%s6] sm:$0xff]
    %v77 = vld [vmem:[%s6 + $0x8] sm:$0xff]
    %v78 = vld [vmem:[%s6 + $0x10] sm:$0xff]
    %v79 = vld [vmem:[%s6 + $0x18] sm:$0xff]
    %v80 = vld [vmem:[%s7] sm:$0xff]
    %v81 = vld [vmem:[%s7 + $0x8] sm:$0xff]
    %v82 = vld [vmem:[%s7 + $0x10] sm:$0xff]
    %v83 = vld [vmem:[%s7 + $0x18] sm:$0xff]
    %v84 = vld [vmem:[%s8] sm:$0xff]
    %v85 = vld [vmem:[%s8 + $0x8] sm:$0xff]
    %v86 = vld [vmem:[%s9] sm:$0xff]
    %v87 = vld [vmem:[%s9 + $0x8] sm:$0xff]
    %v88 = vld [vmem:[%s10] sm:$0x1]
    %v89 = vld [vmem:[#allocation2] sm:$0x1]
    %v90 = vld [vmem:[%s0] sm:$0x1]
    %v91 = vld [vmem:[%s1] sm:$0x1]
    %v92 = vlaneseq
    %v93 = vshrl.u32 %v92, 7
    %v94 = vadd.s32 %v93, 8
    %v95 = vadd.s32 %v93, 16
    %v96 = vadd.s32 %v93, 24
    %v97 = vperm.slane %v90, 0
    %vm98 = vcmp.eq.s32.totalorder %v93, %v97
    %vm99 = vcmp.eq.s32.totalorder %v94, %v97
    %vm100 = vcmp.eq.s32.totalorder %v95, %v97
    %vm101 = vcmp.eq.s32.totalorder %v96, %v97
    %v102 = vperm.slane %v91, 0
    %vm103 = vcmp.eq.s32.totalorder %v93, %v102
    %vm104 = vcmp.eq.s32.totalorder %v94, %v102
    %vm105 = vcmp.eq.s32.totalorder %v95, %v102
    %vm106 = vcmp.eq.s32.totalorder %v96, %v102
    %vm107 = vmor %vm98, %vm103
    %vm108 = vmor %vm99, %vm104
    %vm109 = vmor %vm100, %vm105
    %vm110 = vmor %vm101, %vm106
    %v111 = vsel %vm107, 1, 0
    %v112 = vsel %vm108, 1, 0
    %v113 = vsel %vm109, 1, 0
    %v114 = vsel %vm110, 1, 0
    %v115 = vcvt.s32.f32 %v111
    %v116 = vcvt.s32.f32 %v112
    %v117 = vcvt.s32.f32 %v113
    %v118 = vcvt.s32.f32 %v114
    %120 = vset.pattern.permute.xlu0 0
    %121 = vperm.xlu0 %120, %v53
    %v122 = vpop.permute.xlu0 %121
    %125 = vset.pattern.permute.xlu0 0
    %126 = vperm.xlu0 %125, %v54
    %v127 = vpop.permute.xlu0 %126
    %130 = vset.pattern.permute.xlu0 0
    %131 = vperm.xlu0 %130, %v55
    %v132 = vpop.permute.xlu0 %131
    %135 = vset.pattern.permute.xlu0 0
    %136 = vperm.xlu0 %135, %v56
    %v137 = vpop.permute.xlu0 %136
    %140 = vset.pattern.permute.xlu0 0
    %141 = vperm.xlu0 %140, %v57
    %v142 = vpop.permute.xlu0 %141
    %145 = vset.pattern.permute.xlu0 0
    %146 = vperm.xlu0 %145, %v58
    %v147 = vpop.permute.xlu0 %146
    %150 = vset.pattern.permute.xlu0 0
    %151 = vperm.xlu0 %150, %v59
    %v152 = vpop.permute.xlu0 %151
    %155 = vset.pattern.permute.xlu0 0
    %156 = vperm.xlu0 %155, %v60
    %v157 = vpop.permute.xlu0 %156
    %160 = vset.pattern.permute.xlu0 0
    %161 = vperm.xlu0 %160, %v61
    %v162 = vpop.permute.xlu0 %161
    %vm164 = vcmask 244736
    %v166 = vsel %vm164, %v44, 0
    %v169 = vsel %vm164, %v45, 0
    %v172 = vsel %vm164, %v46, 0
    %v175 = vsel %vm164, %v47, 0
    %v178 = vsel %vm164, %v48, 0
    %v181 = vsel %vm164, %v49, 0
    %v184 = vsel %vm164, %v50, 0
    %v187 = vsel %vm164, %v51, 0
    %v190 = vsel %vm164, %v52, 0
    %vm192 = vcmask 1045504
    %v194 = vsel %vm192, %v118, 0
    %196 = vmatpush.msra.mxu0 0.0
    %197 = vmatpush.msra.mxu0 0.0
    %198 = vmatpush.msra.mxu0 0.0
    %199 = vmatpush.msra.mxu0 0.0
    %200 = vmatpush.msra.mxu0 0.0
    %201 = vmatpush.msra.mxu0 0.0
    %202 = vmatpush.msra.mxu0 0.0
    %203 = vmatpush.msra.mxu0 0.0
    %204 = vmatpush.msra.mxu0 0.0
    %205 = vmatpush.msra.mxu0 0.0
    %206 = vmatpush.msra.mxu0 0.0
    %207 = vmatpush.msra.mxu0 0.0
    %208 = vmatpush.msra.mxu0 %v194
    %209 = vmatpush.msra.mxu0 %v117
    %210 = vmatpush.msra.mxu0 %v116
    %211 = vmatpush.msra.mxu0 %v115
    %212 = vmatmul.f32.gmra.mxu0 %v166
    %v213 = vpop.f32.mrf.mxu0
    %v214 = vadd.f32 %v122, %v213
    %215 = vmatmul.f32.gmra.mxu0 %v169
    %v216 = vpop.f32.mrf.mxu0
    %v217 = vadd.f32 %v127, %v216
    %218 = vmatmul.f32.gmra.mxu0 %v172
    %v219 = vpop.f32.mrf.mxu0
    %v220 = vadd.f32 %v132, %v219
    %221 = vmatmul.f32.gmra.mxu0 %v175
    %v222 = vpop.f32.mrf.mxu0
    %v223 = vadd.f32 %v137, %v222
    %224 = vmatmul.f32.gmra.mxu0 %v178
    %v225 = vpop.f32.mrf.mxu0
    %v226 = vadd.f32 %v142, %v225
    %227 = vmatmul.f32.gmra.mxu0 %v181
    %v228 = vpop.f32.mrf.mxu0
    %v229 = vadd.f32 %v147, %v228
    %230 = vmatmul.f32.gmra.mxu0 %v184
    %v231 = vpop.f32.mrf.mxu0
    %v232 = vadd.f32 %v152, %v231
    %233 = vmatmul.f32.gmra.mxu0 %v187
    %v234 = vpop.f32.mrf.mxu0
    %v235 = vadd.f32 %v157, %v234
    %236 = vmatmul.f32.gmra.mxu0 %v190
    %v237 = vpop.f32.mrf.mxu0
    %v238 = vadd.f32 %v162, %v237
    %239 = vdwg.mxu0
    %v240 = vmax.f32 %v214, 0.0
    %v241 = vmax.f32 %v217, 0.0
    %v242 = vmax.f32 %v220, 0.0
    %v243 = vmax.f32 %v223, 0.0
    %v244 = vmax.f32 %v226, 0.0
    %v245 = vmax.f32 %v229, 0.0
    %v246 = vmax.f32 %v232, 0.0
    %v247 = vmax.f32 %v235, 0.0
    %v248 = vmax.f32 %v238, 0.0
    %250 = vset.pattern.permute.xlu0 0
    %251 = vperm.xlu0 %250, %v69
    %v252 = vpop.permute.xlu0 %251
    %255 = vset.pattern.permute.xlu0 0
    %256 = vperm.xlu0 %255, %v70
    %v257 = vpop.permute.xlu0 %256
    %260 = vset.pattern.permute.xlu0 0
    %261 = vperm.xlu0 %260, %v71
    %v262 = vpop.permute.xlu0 %261
    %265 = vset.pattern.permute.xlu0 0
    %266 = vperm.xlu0 %265, %v72
    %v267 = vpop.permute.xlu0 %266
    %270 = vset.pattern.permute.xlu0 0
    %271 = vperm.xlu0 %270, %v73
    %v272 = vpop.permute.xlu0 %271
    %275 = vset.pattern.permute.xlu0 0
    %276 = vperm.xlu0 %275, %v74
    %v277 = vpop.permute.xlu0 %276
    %280 = vset.pattern.permute.xlu0 0
    %281 = vperm.xlu0 %280, %v75
    %v282 = vpop.permute.xlu0 %281
    %vm284 = vcmask 588800
    %v286 = vsel %vm284, %v62, 0
    %v289 = vsel %vm284, %v63, 0
    %v292 = vsel %vm284, %v64, 0
    %v295 = vsel %vm284, %v65, 0
    %v298 = vsel %vm284, %v66, 0
    %v301 = vsel %vm284, %v67, 0
    %v304 = vsel %vm284, %v68, 0
    %306 = vmatpush.msra.mxu0 0.0
    %307 = vmatpush.msra.mxu0 0.0
    %308 = vmatpush.msra.mxu0 0.0
    %309 = vmatpush.msra.mxu0 0.0
    %310 = vmatpush.msra.mxu0 0.0
    %311 = vmatpush.msra.mxu0 0.0
    %312 = vmatpush.msra.mxu0 0.0
    %313 = vmatpush.msra.mxu0 %v248
    %314 = vmatpush.msra.mxu0 %v247
    %315 = vmatpush.msra.mxu0 %v246
    %316 = vmatpush.msra.mxu0 %v245
    %317 = vmatpush.msra.mxu0 %v244
    %318 = vmatpush.msra.mxu0 %v243
    %319 = vmatpush.msra.mxu0 %v242
    %320 = vmatpush.msra.mxu0 %v241
    %321 = vmatpush.msra.mxu0 %v240
    %322 = vmatmul.f32.gmra.mxu0 %v286
    %v323 = vpop.f32.mrf.mxu0
    %v324 = vadd.f32 %v252, %v323
    %325 = vmatmul.f32.gmra.mxu0 %v289
    %v326 = vpop.f32.mrf.mxu0
    %v327 = vadd.f32 %v257, %v326
    %328 = vmatmul.f32.gmra.mxu0 %v292
    %v329 = vpop.f32.mrf.mxu0
    %v330 = vadd.f32 %v262, %v329
    %331 = vmatmul.f32.gmra.mxu0 %v295
    %v332 = vpop.f32.mrf.mxu0
    %v333 = vadd.f32 %v267, %v332
    %334 = vmatmul.f32.gmra.mxu0 %v298
    %v335 = vpop.f32.mrf.mxu0
    %v336 = vadd.f32 %v272, %v335
    %337 = vmatmul.f32.gmra.mxu0 %v301
    %v338 = vpop.f32.mrf.mxu0
    %v339 = vadd.f32 %v277, %v338
    %340 = vmatmul.f32.gmra.mxu0 %v304
    %v341 = vpop.f32.mrf.mxu0
    %v342 = vadd.f32 %v282, %v341
    %343 = vdwg.mxu0
    %v344 = vmax.f32 %v324, 0.0
    %v345 = vmax.f32 %v327, 0.0
    %v346 = vmax.f32 %v330, 0.0
    %v347 = vmax.f32 %v333, 0.0
    %v348 = vmax.f32 %v336, 0.0
    %v349 = vmax.f32 %v339, 0.0
    %v350 = vmax.f32 %v342, 0.0
    %352 = vset.pattern.permute.xlu0 0
    %353 = vperm.xlu0 %352, %v80
    %v354 = vpop.permute.xlu0 %353
    %357 = vset.pattern.permute.xlu0 0
    %358 = vperm.xlu0 %357, %v81
    %v359 = vpop.permute.xlu0 %358
    %362 = vset.pattern.permute.xlu0 0
    %363 = vperm.xlu0 %362, %v82
    %v364 = vpop.permute.xlu0 %363
    %367 = vset.pattern.permute.xlu0 0
    %368 = vperm.xlu0 %367, %v83
    %v369 = vpop.permute.xlu0 %368
    %vm371 = vcmask 457728
    %v373 = vsel %vm371, %v76, 0
    %v376 = vsel %vm371, %v77, 0
    %v379 = vsel %vm371, %v78, 0
    %v382 = vsel %vm371, %v79, 0
    %384 = vmatpush.msra.mxu0 0.0
    %385 = vmatpush.msra.mxu0 0.0
    %386 = vmatpush.msra.mxu0 0.0
    %387 = vmatpush.msra.mxu0 0.0
    %388 = vmatpush.msra.mxu0 0.0
    %389 = vmatpush.msra.mxu0 0.0
    %390 = vmatpush.msra.mxu0 0.0
    %391 = vmatpush.msra.mxu0 0.0
    %392 = vmatpush.msra.mxu0 0.0
    %393 = vmatpush.msra.mxu0 %v350
    %394 = vmatpush.msra.mxu0 %v349
    %395 = vmatpush.msra.mxu0 %v348
    %396 = vmatpush.msra.mxu0 %v347
    %397 = vmatpush.msra.mxu0 %v346
    %398 = vmatpush.msra.mxu0 %v345
    %399 = vmatpush.msra.mxu0 %v344
    %400 = vmatmul.f32.gmra.mxu0 %v373
    %v401 = vpop.f32.mrf.mxu0
    %v402 = vadd.f32 %v354, %v401
    %403 = vmatmul.f32.gmra.mxu0 %v376
    %v404 = vpop.f32.mrf.mxu0
    %v405 = vadd.f32 %v359, %v404
    %406 = vmatmul.f32.gmra.mxu0 %v379
    %v407 = vpop.f32.mrf.mxu0
    %v408 = vadd.f32 %v364, %v407
    %409 = vmatmul.f32.gmra.mxu0 %v382
    %v410 = vpop.f32.mrf.mxu0
    %v411 = vadd.f32 %v369, %v410
    %412 = vdwg.mxu0
    %v413 = vmax.f32 %v402, 0.0
    %v414 = vmax.f32 %v405, 0.0
    %v415 = vmax.f32 %v408, 0.0
    %v416 = vmax.f32 %v411, 0.0
    %418 = vset.pattern.permute.xlu0 0
    %419 = vperm.xlu0 %418, %v86
    %v420 = vpop.permute.xlu0 %419
    %423 = vset.pattern.permute.xlu0 0
    %424 = vperm.xlu0 %423, %v87
    %v425 = vpop.permute.xlu0 %424
    %vm427 = vcmask 261120
    %v429 = vsel %vm427, %v84, 0
    %v432 = vsel %vm427, %v85, 0
    %434 = vmatpush.msra.mxu0 0.0
    %435 = vmatpush.msra.mxu0 0.0
    %436 = vmatpush.msra.mxu0 0.0
    %437 = vmatpush.msra.mxu0 0.0
    %438 = vmatpush.msra.mxu0 0.0
    %439 = vmatpush.msra.mxu0 0.0
    %440 = vmatpush.msra.mxu0 0.0
    %441 = vmatpush.msra.mxu0 0.0
    %442 = vmatpush.msra.mxu0 0.0
    %443 = vmatpush.msra.mxu0 0.0
    %444 = vmatpush.msra.mxu0 0.0
    %445 = vmatpush.msra.mxu0 0.0
    %446 = vmatpush.msra.mxu0 %v416
    %447 = vmatpush.msra.mxu0 %v415
    %448 = vmatpush.msra.mxu0 %v414
    %449 = vmatpush.msra.mxu0 %v413
    %450 = vmatmul.f32.gmra.mxu0 %v429
    %v451 = vpop.f32.mrf.mxu0
    %v452 = vadd.f32 %v420, %v451
    %453 = vmatmul.f32.gmra.mxu0 %v432
    %v454 = vpop.f32.mrf.mxu0
    %v455 = vadd.f32 %v425, %v454
    %456 = vdwg.mxu0
    %v457 = vmax.f32 %v452, 0.0
    %v458 = vmax.f32 %v455, 0.0
    %460 = vset.pattern.permute.xlu0 0
    %461 = vperm.xlu0 %460, %v89
    %v462 = vpop.permute.xlu0 %461
    %v464 = vperm.slane %v462, 0
    %vm465 = vcmask 130048
    %v467 = vsel %vm465, %v88, 0
    %469 = vmatpush.msra.mxu0 0.0
    %470 = vmatpush.msra.mxu0 0.0
    %471 = vmatpush.msra.mxu0 0.0
    %472 = vmatpush.msra.mxu0 0.0
    %473 = vmatpush.msra.mxu0 0.0
    %474 = vmatpush.msra.mxu0 0.0
    %475 = vmatpush.msra.mxu0 0.0
    %476 = vmatpush.msra.mxu0 0.0
    %477 = vmatpush.msra.mxu0 0.0
    %478 = vmatpush.msra.mxu0 0.0
    %479 = vmatpush.msra.mxu0 0.0
    %480 = vmatpush.msra.mxu0 0.0
    %481 = vmatpush.msra.mxu0 0.0
    %482 = vmatpush.msra.mxu0 0.0
    %483 = vmatpush.msra.mxu0 %v458
    %484 = vmatpush.msra.mxu0 %v457
    %485 = vmatmul.f32.gmra.mxu0 %v467
    %v486 = vpop.f32.mrf.mxu0
    %v487 = vadd.f32 %v464, %v486
    %488 = vdwg.mxu0
    %v489 = vxor.u32 %v487, 2147483648
    %v490 = vmul.f32 %v489, 1.442695
    %v491 = vpow.pop %v490
    %v492 = vadd.f32 %v491, 1.0
    %v493 = vrcp.pop %v492
    %v494 = vmul.f32 %v492, %v493
    %v495 = vsub.f32 1.0, %v494
    %v496 = vmul.f32 %v493, %v495
    %v497 = vadd.f32 %v493, %v496
    %vm498 = vweird.f32 %v492
    %vm499 = vweird.f32 %v493
    %vm500 = vmor %vm498, %vm499
    %v501 = vsel %vm500, %v493, %v497
    %v502 = vand.u32 2147483647, %v492
    %vm503 = vcmp.eq.f32.partialorder %v502, 8.507059e+37
    %v504 = vand.u32 %v492, 2147483648
    %v505 = vor.u32 1.1754944e-38, %v504
    %v506 = vsel %vm503, %v505, %v501
    %v507 = vmul.f32 1.0, %v506
    %508 = vst [vmem:[#allocation3] sm:$0x1] %v507
    // Predicated region
    $region50: #{tpu_custom_call.1} parent=1 // pred_check
      _
    $region51: #{tpu_custom_call.1} parent=1 // pred_check_branch
      %510 = sbr.rel (0) target = $region53
    $region52: #{tpu_custom_call.1} parent=1 // pred_region
      %512 = vsyncadd [#allocation4], 0
      %s514 = sshll.u32 [#allocation3], 4
      %s515 = int_to_ptr.vmem [resolvable:$true] %s514
      %s516 = sshll.u32 %s12, 4
      %s517 = int_to_ptr.hbm [resolvable:$true] %s516
      %519 = dma.vmem_to_hbm [thread:$0]  %s515, 16, %s517, [#allocation4]
    $region53: #{tpu_custom_call.1} parent=1 // pred_fallthru
      _
    // Predicated region
    $region54: #{tpu_custom_call.1} parent=1 // pred_check
      _
    $region55: #{tpu_custom_call.1} parent=1 // pred_check_branch
      %521 = sbr.rel (0) target = $region57
    $region56: #{tpu_custom_call.1} parent=1 // pred_region
      %523 = dma.done [#allocation4], 16
    $region57: #{tpu_custom_call.1} parent=1 // pred_fallthru
      _
    %524 = vsyncpa [#allocation4], 1

</llo_original>
